<compile_context>
chip_gen: v6e
topology: v6e:2x2x1
jax: 0.10.0
libtpu: 0.0.40
codegen_flags: <defaults>
</compile_context>

<pallas_src>
import jax
import jax.numpy as jnp
from jax.experimental import pallas as pl
from jax.experimental.pallas import tpu as pltpu


def bit_estimator_kernel(x_ref, p_ref, o_ref):
    # x_ref: (BR, BL) tile of the flattened input.
    # p_ref: (BR, 11) packed, precomputed per-row parameters:
    #   [s1, b1, ta1, s2, b2, ta2, s3, b3, ta3, s4, b4]
    #   where s_i = softplus(h_i), ta_i = tanh(a_i).
    x = x_ref[...].astype(jnp.float32)
    p = p_ref[...].astype(jnp.float32)

    def col(i):
        # (BR, 1) column -> lane-broadcast against the (BR, BL) tile.
        return p[:, i:i + 1]

    # Bitparm 1..3:  y = x*softplus(h)+b ; x = y + tanh(y)*tanh(a)
    y = x * col(0) + col(1)
    x = y + jnp.tanh(y) * col(2)
    y = x * col(3) + col(4)
    x = y + jnp.tanh(y) * col(5)
    y = x * col(6) + col(7)
    x = y + jnp.tanh(y) * col(8)
    # Final Bitparm: sigmoid(x*softplus(h)+b), via the tanh identity so the
    # logistic stays on the EUP (no multi-op f32 divide on the VALU).
    y = x * col(9) + col(10)
    o_ref[...] = (0.5 * (jnp.tanh(0.5 * y) + 1.0)).astype(o_ref.dtype)


def _chip_config():
    """(row-tile cap, lane-tile cap, vmem_limit_bytes), per chip generation."""
    try:
        vmem_bytes = pltpu.get_tpu_info().vmem_capacity_bytes
    except Exception:
        vmem_bytes = 64 << 20  # unknown -> assume the smallest (v7x-sized) VMEM
    if vmem_bytes >= (100 << 20):        # v5e / v6e: 128 MiB physical VMEM
        return 512, 2048, 64 << 20       # ~4 MiB tiles, ~16 MiB double-buffered
    return 256, 2048, 32 << 20           # v7x: 64 MiB per TC, keep ~8 MiB used


def _round_up(v, m):
    return ((v + m - 1) // m) * m


def _pick_block(dim, align, cap):
    """Biggest aligned block <= cap; prefer a divisor of dim (no masked tail)."""
    if dim <= cap:
        return dim                        # full dim is always a legal block
    best = (cap // align) * align
    for cand in range(best, align - 1, -align):
        if dim % cand == 0:
            return cand
    return best


@jax.jit
def bit_estimator_forward(x_nchw, params):
    """x_nchw: (N, C, H, W).  params: dict of (C,) arrays h1..h4, b1..b4, a1..a3."""
    N, C, H, W = x_nchw.shape
    R = N * C
    L = H * W
    x2 = x_nchw.reshape(R, L)  # zero-cost reshape; row = n*C + c

    # Precompute parameter transcendentals once (stable softplus) and pack.
    sp = jax.nn.softplus
    cols = [
        sp(params["h1"]), params["b1"], jnp.tanh(params["a1"]),
        sp(params["h2"]), params["b2"], jnp.tanh(params["a2"]),
        sp(params["h3"]), params["b3"], jnp.tanh(params["a3"]),
        sp(params["h4"]), params["b4"],
    ]
    p = jnp.stack([c.astype(jnp.float32) for c in cols], axis=-1)  # (C, 11)
    p = jnp.tile(p, (N, 1))  # (N*C, 11), aligned with x2 rows

    cap_r, cap_l, vmem_limit = _chip_config()
    block_r = _pick_block(R, 8, cap_r)
    block_l = _pick_block(L, 128, cap_l)

    # Guarantee >= 2 grid steps along a "parallel" axis when possible so both
    # v7x TensorCores receive work (also lets DMA overlap compute everywhere).
    if pl.cdiv(R, block_r) == 1 and pl.cdiv(L, block_l) == 1:
        if L > 128:
            block_l = _round_up(pl.cdiv(L, 2), 128)
        elif R > 8:
            block_r = _round_up(pl.cdiv(R, 2), 8)

    grid = (pl.cdiv(R, block_r), pl.cdiv(L, block_l))

    x_spec = pl.BlockSpec((block_r, block_l), lambda i, j: (i, j))
    # Lane axis (j) is the innermost grid dim, so this block index (i, 0) is
    # unchanged across consecutive steps and the narrow 11-lane DMA is elided.
    p_spec = pl.BlockSpec((block_r, 11), lambda i, j: (i, 0))

    elem_bytes = 2 * jnp.dtype(x_nchw.dtype).itemsize  # read x + write out
    cost = pl.CostEstimate(
        flops=14 * R * L,
        transcendentals=4 * R * L,
        bytes_accessed=elem_bytes * R * L,
    )

    out = pl.pallas_call(
        bit_estimator_kernel,
        out_shape=jax.ShapeDtypeStruct((R, L), x_nchw.dtype),
        grid_spec=pltpu.PrefetchScalarGridSpec(
            num_scalar_prefetch=0,
            grid=grid,
            in_specs=[x_spec, p_spec],
            out_specs=x_spec,
        ),
        compiler_params=pltpu.CompilerParams(
            dimension_semantics=("parallel", "parallel"),
            vmem_limit_bytes=vmem_limit,
        ),
        cost_estimate=cost,
    )(x2, p)

    return out.reshape(N, C, H, W)


def init_params(channel, key):
    # Matches torch.nn.init.normal_(torch.empty(channel), mean=0, std=0.01)
    names = ["h1", "b1", "a1", "h2", "b2", "a2", "h3", "b3", "a3", "h4", "b4"]
    keys = jax.random.split(key, len(names))
    return {
        name: 0.01 * jax.random.normal(k, (channel,), dtype=jnp.float32)
        for name, k in zip(names, keys)
    }


def _reference_forward(x, params):
    def bp(x, h, b, a=None, final=False):
        h = h.reshape(1, -1, 1, 1)
        b = b.reshape(1, -1, 1, 1)
        if final:
            return jax.nn.sigmoid(x * jax.nn.softplus(h) + b)
        a = a.reshape(1, -1, 1, 1)
        y = x * jax.nn.softplus(h) + b
        return y + jnp.tanh(y) * jnp.tanh(a)

    x = bp(x, params["h1"], params["b1"], params["a1"])
    x = bp(x, params["h2"], params["b2"], params["a2"])
    x = bp(x, params["h3"], params["b3"], params["a3"])
    return bp(x, params["h4"], params["b4"], final=True)


if __name__ == "__main__":
    key = jax.random.PRNGKey(0)
    k_x, k_p, k_x2 = jax.random.split(key, 3)

    # Main test: small, lane-aligned shape (f32 I/O).
    N, C, H, W = 2, 4, 16, 16
    x = jax.random.normal(k_x, (N, C, H, W), dtype=jnp.float32)
    params = init_params(C, k_p)

    out = bit_estimator_forward(x, params)
    jax.block_until_ready(out)
    assert out.shape == (N, C, H, W)
    ref = _reference_forward(x, params)
    assert jnp.allclose(out, ref, atol=1e-5, rtol=1e-5)

    # Secondary test: unaligned lane width exercises the masked tail tile.
    x_odd = jax.random.normal(k_x2, (1, 8, 13, 10), dtype=jnp.float32)
    params_odd = init_params(8, k_p)
    out_odd = bit_estimator_forward(x_odd, params_odd)
    jax.block_until_ready(out_odd)
    ref_odd = _reference_forward(x_odd, params_odd)
    assert jnp.allclose(out_odd, ref_odd, atol=1e-5, rtol=1e-5)

    # TODO(synk): EntropyCoder (rANS encode/decode, pmf_to_quantized_cdf) and
    # BitEstimator.update() are host-side / C++ and are not expressed here.

    print("KERNEL_OK")
</pallas_src>

<mosaic_0001>
module attributes {stable_mosaic.version = 11 : i64} {
  func.func @bit_estimator_kernel(%arg0: i32, %arg1: i32, %arg2: memref<8x128xf32, #tpu.memory_space<vmem>>, %arg3: memref<8x11xf32, #tpu.memory_space<vmem>>, %arg4: memref<8x128xf32, #tpu.memory_space<vmem>>) attributes {dimension_semantics = [#tpu.dimension_semantics<parallel>, #tpu.dimension_semantics<parallel>], iteration_bounds = array<i64: 1, 2>, scalar_prefetch = 0 : i64, scratch_operands = 0 : i64, tpu.core_type = #tpu.core_type<tc>, window_params = [{transform_indices = @transform_0, window_bounds = array<i64: 8, 128>}, {transform_indices = @transform_1, window_bounds = array<i64: 8, 11>}, {transform_indices = @transform_2, window_bounds = array<i64: 8, 128>}]} {
    %c0 = arith.constant 0 : index
    %c0_0 = arith.constant 0 : index
    %0 = vector.load %arg2[%c0, %c0_0] : memref<8x128xf32, #tpu.memory_space<vmem>>, vector<8x128xf32>
    %c0_1 = arith.constant 0 : index
    %c0_2 = arith.constant 0 : index
    %1 = vector.load %arg3[%c0_1, %c0_2] : memref<8x11xf32, #tpu.memory_space<vmem>>, vector<8x11xf32>
    %2 = vector.extract_strided_slice %1 {offsets = [0, 0], sizes = [8, 1], strides = [1, 1]} : vector<8x11xf32> to vector<8x1xf32>
    %3 = vector.broadcast %2 : vector<8x1xf32> to vector<8x128xf32>
    %4 = arith.mulf %0, %3 : vector<8x128xf32>
    %5 = vector.extract_strided_slice %1 {offsets = [0, 1], sizes = [8, 1], strides = [1, 1]} : vector<8x11xf32> to vector<8x1xf32>
    %6 = vector.broadcast %5 : vector<8x1xf32> to vector<8x128xf32>
    %7 = arith.addf %4, %6 : vector<8x128xf32>
    %8 = math.tanh %7 : vector<8x128xf32>
    %9 = vector.extract_strided_slice %1 {offsets = [0, 2], sizes = [8, 1], strides = [1, 1]} : vector<8x11xf32> to vector<8x1xf32>
    %10 = vector.broadcast %9 : vector<8x1xf32> to vector<8x128xf32>
    %11 = arith.mulf %8, %10 : vector<8x128xf32>
    %12 = arith.addf %7, %11 : vector<8x128xf32>
    %13 = vector.extract_strided_slice %1 {offsets = [0, 3], sizes = [8, 1], strides = [1, 1]} : vector<8x11xf32> to vector<8x1xf32>
    %14 = vector.broadcast %13 : vector<8x1xf32> to vector<8x128xf32>
    %15 = arith.mulf %12, %14 : vector<8x128xf32>
    %16 = vector.extract_strided_slice %1 {offsets = [0, 4], sizes = [8, 1], strides = [1, 1]} : vector<8x11xf32> to vector<8x1xf32>
    %17 = vector.broadcast %16 : vector<8x1xf32> to vector<8x128xf32>
    %18 = arith.addf %15, %17 : vector<8x128xf32>
    %19 = math.tanh %18 : vector<8x128xf32>
    %20 = vector.extract_strided_slice %1 {offsets = [0, 5], sizes = [8, 1], strides = [1, 1]} : vector<8x11xf32> to vector<8x1xf32>
    %21 = vector.broadcast %20 : vector<8x1xf32> to vector<8x128xf32>
    %22 = arith.mulf %19, %21 : vector<8x128xf32>
    %23 = arith.addf %18, %22 : vector<8x128xf32>
    %24 = vector.extract_strided_slice %1 {offsets = [0, 6], sizes = [8, 1], strides = [1, 1]} : vector<8x11xf32> to vector<8x1xf32>
    %25 = vector.broadcast %24 : vector<8x1xf32> to vector<8x128xf32>
    %26 = arith.mulf %23, %25 : vector<8x128xf32>
    %27 = vector.extract_strided_slice %1 {offsets = [0, 7], sizes = [8, 1], strides = [1, 1]} : vector<8x11xf32> to vector<8x1xf32>
    %28 = vector.broadcast %27 : vector<8x1xf32> to vector<8x128xf32>
    %29 = arith.addf %26, %28 : vector<8x128xf32>
    %30 = math.tanh %29 : vector<8x128xf32>
    %31 = vector.extract_strided_slice %1 {offsets = [0, 8], sizes = [8, 1], strides = [1, 1]} : vector<8x11xf32> to vector<8x1xf32>
    %32 = vector.broadcast %31 : vector<8x1xf32> to vector<8x128xf32>
    %33 = arith.mulf %30, %32 : vector<8x128xf32>
    %34 = arith.addf %29, %33 : vector<8x128xf32>
    %35 = vector.extract_strided_slice %1 {offsets = [0, 9], sizes = [8, 1], strides = [1, 1]} : vector<8x11xf32> to vector<8x1xf32>
    %36 = vector.broadcast %35 : vector<8x1xf32> to vector<8x128xf32>
    %37 = arith.mulf %34, %36 : vector<8x128xf32>
    %38 = vector.extract_strided_slice %1 {offsets = [0, 10], sizes = [8, 1], strides = [1, 1]} : vector<8x11xf32> to vector<8x1xf32>
    %39 = vector.broadcast %38 : vector<8x1xf32> to vector<8x128xf32>
    %40 = arith.addf %37, %39 : vector<8x128xf32>
    %cst = arith.constant 5.000000e-01 : f32
    %41 = vector.broadcast %cst : f32 to vector<8x128xf32>
    %42 = arith.mulf %41, %40 : vector<8x128xf32>
    %43 = math.tanh %42 : vector<8x128xf32>
    %cst_3 = arith.constant 1.000000e+00 : f32
    %44 = vector.broadcast %cst_3 : f32 to vector<8x128xf32>
    %45 = arith.addf %43, %44 : vector<8x128xf32>
    %cst_4 = arith.constant 5.000000e-01 : f32
    %46 = vector.broadcast %cst_4 : f32 to vector<8x128xf32>
    %47 = arith.mulf %46, %45 : vector<8x128xf32>
    %c0_5 = arith.constant 0 : index
    %c0_6 = arith.constant 0 : index
    %48 = vector.load %arg4[%c0_5, %c0_6] : memref<8x128xf32, #tpu.memory_space<vmem>>, vector<8x128xf32>
    tpu.vector_store %arg4[%c0_5, %c0_6], %47 {strides = array<i32>} : memref<8x128xf32, #tpu.memory_space<vmem>>, vector<8x128xf32>,
    return
  }
  func.func @transform_0(%arg0: i32, %arg1: i32) -> (i32, i32) {
    %c0_i32 = arith.constant 0 : i32
    return %arg0, %arg1 : i32, i32
  }
  func.func @transform_1(%arg0: i32, %arg1: i32) -> (i32, i32) {
    %c0_i32 = arith.constant 0 : i32
    %c0_i32_0 = arith.constant 0 : i32
    return %arg0, %c0_i32 : i32, i32
  }
  func.func @transform_2(%arg0: i32, %arg1: i32) -> (i32, i32) {
    %c0_i32 = arith.constant 0 : i32
    return %arg0, %arg1 : i32, i32
  }
}

</mosaic_0001>

<llo_original>
// kernel: bit_estimator_forward.1
$region0: #{bit_estimator_forward.1}
  #allocation0 [shape = 'u32[]', space=smem, size = 0x4, offset = 0x4, fixed_abs, tag = 'smem constant byte address 0x4 - core index']
  #allocation1 [shape = 'u32[144,128]{1,0:T(1,128)}', space=vmem, size = 0x12000, scoped, tag = 'internal scratch']
  %s0 = inlined_call_operand.vmem [shape: f32[8,256], index: 0, kind: input, shape index: {}]
  %s1 = inlined_call_operand.vmem [shape: f32[8,11], index: 1, kind: input, shape index: {}]
  %s2 = inlined_call_operand.vmem [shape: f32[8,256], index: 2, kind: output, shape index: {}]
  %s3 = sld [smem:[#allocation0]]
  $region41: #{bit_estimator_forward.1} parent=0
    _
  %s5 = ssub.s32 1, %s3
  %s6 = scalar_select 0, %s5, %s3
  loop: start=0, step=1, limit=4
  $region2: #{bit_estimator_forward.1} parent=0 // loop_pre_header
    _
  $region3: #{bit_estimator_forward.1} parent=0 // loop_header
    %s8 = sphi 0, %s12
    %p9 = scmp.ge.s32.totalorder %s8, 4
    %s15 = sphi 0, %s27
    %s16 = sphi 0, %s23
    %s17 = sphi 0, %s15
    %s18 = sphi 0, %s16
    %s19 = sphi 0, %s17
    %s20 = sphi 0, %s18
    %s32 = sphi 0, %s34
    %s35 = sphi 0, %s32
    %s36 = sphi 0, %s35
    %s52 = sphi 0, %s36
    %s58 = sphi 0, %s60
    %s61 = sphi 0, %s58
    %s62 = sphi 0, %s61
    %s78 = sphi 0, %s62
    %s86 = sphi 0, %s88
    %s89 = sphi 0, %s86
    %s90 = sphi 0, %s89
    %s106 = sphi 0, %s90
  $region4: #{bit_estimator_forward.1} parent=0 // loop_header_branch
    %11 = sbr.rel (%p9) target = $region8
  $region5: #{bit_estimator_forward.1} parent=0 // loop_body
    %s13 = ssub.s32 %s8, 1
    %s14 = ssub.s32 %s8, 2
    %s21 = sadd.s32 1, %s16
    %p22 = scmp.ge.s32.totalorder %s21, 2
    %s23 = scalar_select %p22, 0, %s21
    %s24 = sadd.s32 1, %s15
    %s25 = scalar_select %p22, %s24, %s15
    %p26 = scmp.ge.s32.totalorder %s25, 1
    %s27 = scalar_select %p26, 0, %s25
    %s28 = ssub.s32 %s15, %s27
    %s29 = ssub.s32 %s16, %s23
    %s30 = sor.u32 %s28, %s29
    %p31 = scmp.eq.s32.totalorder %s30, 0
    %s33 = sadd.s32 %s32, 1
    %s34 = scalar_select %p31, %s32, %s33
    %p37 = pneg %p31
    %p38 = scmp.eq.s32.totalorder %s8, 1
    %p39 = por %p37, %p38
    %p40 = scmp.ne.s32.totalorder %s32, %s35
    %p41 = scmp.eq.s32.totalorder %s8, 0
    %p42 = por %p40, %p41
    %p43 = scmp.ne.s32.totalorder %s32, %s35
    %p44 = scmp.eq.s32.totalorder %s13, 1
    %p45 = por %p43, %p44
    %p46 = scmp.ne.s32.totalorder %s35, %s36
    %p47 = scmp.eq.s32.totalorder %s13, 0
    %p48 = por %p46, %p47
    %p49 = scmp.ne.s32.totalorder %s35, %s36
    %p50 = scmp.eq.s32.totalorder %s14, 1
    %p51 = por %p49, %p50
    %p53 = scmp.ne.s32.totalorder %s36, %s52
    %p54 = scmp.eq.s32.totalorder %s14, 0
    %p55 = por %p53, %p54
    %s56 = ssub.s32 %s15, %s27
    %p57 = scmp.eq.s32.totalorder %s56, 0
    %s59 = sadd.s32 %s58, 1
    %s60 = scalar_select %p57, %s58, %s59
    %p63 = pneg %p57
    %p64 = scmp.eq.s32.totalorder %s8, 1
    %p65 = por %p63, %p64
    %p66 = scmp.ne.s32.totalorder %s58, %s61
    %p67 = scmp.eq.s32.totalorder %s8, 0
    %p68 = por %p66, %p67
    %p69 = scmp.ne.s32.totalorder %s58, %s61
    %p70 = scmp.eq.s32.totalorder %s13, 1
    %p71 = por %p69, %p70
    %p72 = scmp.ne.s32.totalorder %s61, %s62
    %p73 = scmp.eq.s32.totalorder %s13, 0
    %p74 = por %p72, %p73
    %p75 = scmp.ne.s32.totalorder %s61, %s62
    %p76 = scmp.eq.s32.totalorder %s14, 1
    %p77 = por %p75, %p76
    %p79 = scmp.ne.s32.totalorder %s62, %s78
    %p80 = scmp.eq.s32.totalorder %s14, 0
    %p81 = por %p79, %p80
    %s82 = ssub.s32 %s15, %s27
    %s83 = ssub.s32 %s16, %s23
    %s84 = sor.u32 %s82, %s83
    %p85 = scmp.eq.s32.totalorder %s84, 0
    %s87 = sadd.s32 %s86, 1
    %s88 = scalar_select %p85, %s86, %s87
    %p91 = pneg %p85
    %p92 = scmp.eq.s32.totalorder %s8, 1
    %p93 = por %p91, %p92
    %p94 = scmp.ne.s32.totalorder %s86, %s89
    %p95 = scmp.eq.s32.totalorder %s8, 0
    %p96 = por %p94, %p95
    %p97 = scmp.ne.s32.totalorder %s86, %s89
    %p98 = scmp.eq.s32.totalorder %s13, 1
    %p99 = por %p97, %p98
    %p100 = scmp.ne.s32.totalorder %s89, %s90
    %p101 = scmp.eq.s32.totalorder %s13, 0
    %p102 = por %p100, %p101
    %p103 = scmp.ne.s32.totalorder %s89, %s90
    %p104 = scmp.eq.s32.totalorder %s14, 1
    %p105 = por %p103, %p104
    %p107 = scmp.ne.s32.totalorder %s90, %s106
    %p108 = scmp.eq.s32.totalorder %s14, 0
    %p109 = por %p107, %p108
    %p110 = scmp.le.s32.totalorder 1, %s8
    %p111 = scmp.lt.s32.totalorder %s8, 3
    %p112 = pnand %p110, %p111
    %p113 = pneg %p112
    // Predicated region
    $region9: #{bit_estimator_forward.1} parent=5 // pred_check
      _
    $region10: #{bit_estimator_forward.1} parent=5 // pred_check_branch
      %115 = sbr.rel (%p112) target = $region12
    $region11: #{bit_estimator_forward.1} parent=5 // pred_region
      %s116 = ssub.s32 %s8, 1
      // Predicated region
      $region13: #{bit_estimator_forward.1} parent=11 // pred_check
        %p117 = pneg %p74
      $region14: #{bit_estimator_forward.1} parent=11 // pred_check_branch
        %119 = sbr.rel (%p117) target = $region16
      $region15: #{bit_estimator_forward.1} parent=11 // pred_region
        %p120 = scmp.lt.s32.totalorder %s17, 0
        %s121 = scalar_select %p120, %s17, 0
        %s122 = smul.addr %s121, 8
        %s123 = scalar_lea.vmem %s1, %s122
      $region16: #{bit_estimator_forward.1} parent=11 // pred_fallthru
        _
    $region12: #{bit_estimator_forward.1} parent=5 // pred_fallthru
      _
    %p124 = scmp.lt.s32.totalorder %s8, 2
    // Predicated region
    $region17: #{bit_estimator_forward.1} parent=5 // pred_check
      %p125 = pneg %p124
    $region18: #{bit_estimator_forward.1} parent=5 // pred_check_branch
      %127 = sbr.rel (%p125) target = $region20
    $region19: #{bit_estimator_forward.1} parent=5 // pred_region
      // Predicated region
      $region21: #{bit_estimator_forward.1} parent=19 // pred_check
        %p128 = pneg %p42
      $region22: #{bit_estimator_forward.1} parent=19 // pred_check_branch
        %130 = sbr.rel (%p128) target = $region24
      $region23: #{bit_estimator_forward.1} parent=19 // pred_region
        %p131 = scmp.lt.s32.totalorder %s15, 0
        %s132 = scalar_select %p131, %s15, 0
        %p133 = scmp.lt.s32.totalorder %s16, 1
        %s134 = scalar_select %p133, %s16, 1
        %s135 = smul.addr %s132, 2
        %s136 = sadd.s32 %s134, %s135
        %s137 = smul.addr %s136, 8
        %s138 = scalar_lea.vmem %s0, %s137
      $region24: #{bit_estimator_forward.1} parent=19 // pred_fallthru
        _
    $region20: #{bit_estimator_forward.1} parent=5 // pred_fallthru
      _
    %p139 = scmp.le.s32.totalorder 1, %s8
    %p140 = scmp.lt.s32.totalorder %s8, 3
    %p141 = pnand %p139, %p140
    %p142 = pneg %p141
    // Predicated region
    $region25: #{bit_estimator_forward.1} parent=5 // pred_check
      _
    $region26: #{bit_estimator_forward.1} parent=5 // pred_check_branch
      %144 = sbr.rel (%p141) target = $region28
    $region27: #{bit_estimator_forward.1} parent=5 // pred_region
      %s145 = ssub.s32 %s8, 1
      %p146 = scmp.lt.s32.totalorder %s17, 0
      %s147 = scalar_select %p146, %s17, 0
      %p148 = scmp.lt.s32.totalorder %s18, 1
      %s149 = scalar_select %p148, %s18, 1
      %s150 = smul.addr %s147, 2
      %s151 = sadd.s32 %s149, %s150
      %s152 = smul.addr %s151, 8
      %s153 = scalar_lea.vmem %s0, %s152
      %p154 = pneg %p48
      %p155 = pneg %p45
      %p156 = scmp.lt.s32.totalorder %s17, 0
      %s157 = scalar_select %p156, %s17, 0
      %s158 = smul.addr %s157, 8
      %s159 = scalar_lea.vmem %s1, %s158
      %p160 = pneg %p74
      %p161 = pneg %p71
      %p162 = pneg %p102
      %p163 = pneg %p99
      %p164 = scmp.lt.s32.totalorder %s17, 0
      %s165 = scalar_select %p164, %s17, 0
      %p166 = scmp.lt.s32.totalorder %s18, 1
      %s167 = scalar_select %p166, %s18, 1
      %s168 = smul.addr %s165, 2
      %s169 = sadd.s32 %s167, %s168
      %s170 = smul.addr %s169, 8
      %s171 = scalar_lea.vmem %s2, %s170
      %p172 = scmp.lt.s32.totalorder %s17, 0
      %s173 = scalar_select %p172, %s17, 0
      %p174 = scmp.lt.s32.totalorder %s18, 1
      %s175 = scalar_select %p174, %s18, 1
      %s176 = smul.addr %s173, 2
      %s177 = sadd.s32 %s175, %s176
      %s178 = smul.addr %s177, 8
      %s179 = scalar_lea.vmem %s0, %s178
      %p180 = scmp.lt.s32.totalorder %s17, 0
      %s181 = scalar_select %p180, %s17, 0
      %s182 = smul.addr %s181, 8
      %s183 = scalar_lea.vmem %s1, %s182
      %p184 = scmp.lt.s32.totalorder %s17, 0
      %s185 = scalar_select %p184, %s17, 0
      %p186 = scmp.lt.s32.totalorder %s18, 1
      %s187 = scalar_select %p186, %s18, 1
      %s188 = smul.addr %s185, 2
      %s189 = sadd.s32 %s187, %s188
      %s190 = smul.addr %s189, 8
      %s191 = scalar_lea.vmem %s2, %s190
      %v192 = vld [vmem:[%s179] sm:$0xff]
      %v193 = vld [vmem:[%s183] sm:$0xff]
      %195 = vset.pattern.permute.xlu0 0
      %196 = vperm.xlu0 %195, %v193
      %v197 = vpop.permute.xlu0 %196
      %v199 = vmul.f32 %v192, %v197
      %200 = vset.pattern.permute.xlu0 1
      %201 = vperm.xlu0 %200, %v193
      %v202 = vpop.permute.xlu0 %201
      %v204 = vadd.f32 %v199, %v202
      %v205 = vtanh.pop %v204
      %206 = vset.pattern.permute.xlu0 2
      %207 = vperm.xlu0 %206, %v193
      %v208 = vpop.permute.xlu0 %207
      %v210 = vmul.f32 %v205, %v208
      %v211 = vadd.f32 %v204, %v210
      %212 = vset.pattern.permute.xlu0 3
      %213 = vperm.xlu0 %212, %v193
      %v214 = vpop.permute.xlu0 %213
      %v216 = vmul.f32 %v211, %v214
      %217 = vset.pattern.permute.xlu0 4
      %218 = vperm.xlu0 %217, %v193
      %v219 = vpop.permute.xlu0 %218
      %v221 = vadd.f32 %v216, %v219
      %v222 = vtanh.pop %v221
      %223 = vset.pattern.permute.xlu0 5
      %224 = vperm.xlu0 %223, %v193
      %v225 = vpop.permute.xlu0 %224
      %v227 = vmul.f32 %v222, %v225
      %v228 = vadd.f32 %v221, %v227
      %229 = vset.pattern.permute.xlu0 6
      %230 = vperm.xlu0 %229, %v193
      %v231 = vpop.permute.xlu0 %230
      %v233 = vmul.f32 %v228, %v231
      %234 = vset.pattern.permute.xlu0 7
      %235 = vperm.xlu0 %234, %v193
      %v236 = vpop.permute.xlu0 %235
      %v238 = vadd.f32 %v233, %v236
      %v239 = vtanh.pop %v238
      %240 = vset.pattern.permute.xlu0 8
      %241 = vperm.xlu0 %240, %v193
      %v242 = vpop.permute.xlu0 %241
      %v244 = vmul.f32 %v239, %v242
      %v245 = vadd.f32 %v238, %v244
      %246 = vset.pattern.permute.xlu0 9
      %247 = vperm.xlu0 %246, %v193
      %v248 = vpop.permute.xlu0 %247
      %v250 = vmul.f32 %v245, %v248
      %251 = vset.pattern.permute.xlu0 10
      %252 = vperm.xlu0 %251, %v193
      %v253 = vpop.permute.xlu0 %252
      %v255 = vadd.f32 %v250, %v253
      %v256 = vmul.f32 %v255, 0.5
      %v257 = vtanh.pop %v256
      %v258 = vadd.f32 %v257, 1.0
      %v259 = vmul.f32 %v258, 0.5
      %260 = vst [vmem:[%s191] sm:$0xff] %v259
      %p261 = scmp.lt.s32.totalorder %s17, 0
      %s262 = scalar_select %p261, %s17, 0
      %p263 = scmp.lt.s32.totalorder %s18, 1
      %s264 = scalar_select %p263, %s18, 1
      %s265 = smul.addr %s262, 2
      %s266 = sadd.s32 %s264, %s265
      %s267 = smul.addr %s266, 8
      %s268 = scalar_lea.vmem %s2, %s267
      // Predicated region
      $region29: #{bit_estimator_forward.1} parent=27 // pred_check
        %p269 = pneg %p99
      $region30: #{bit_estimator_forward.1} parent=27 // pred_check_branch
        %271 = sbr.rel (%p269) target = $region32
      $region31: #{bit_estimator_forward.1} parent=27 // pred_region
        _
      $region32: #{bit_estimator_forward.1} parent=27 // pred_fallthru
        _
    $region28: #{bit_estimator_forward.1} parent=5 // pred_fallthru
      _
    %p272 = scmp.le.s32.totalorder 2, %s8
    // Predicated region
    $region33: #{bit_estimator_forward.1} parent=5 // pred_check
      %p273 = pneg %p272
    $region34: #{bit_estimator_forward.1} parent=5 // pred_check_branch
      %275 = sbr.rel (%p273) target = $region36
    $region35: #{bit_estimator_forward.1} parent=5 // pred_region
      %s276 = ssub.s32 %s8, 2
      // Predicated region
      $region37: #{bit_estimator_forward.1} parent=35 // pred_check
        %p277 = pneg %p105
      $region38: #{bit_estimator_forward.1} parent=35 // pred_check_branch
        %279 = sbr.rel (%p277) target = $region40
      $region39: #{bit_estimator_forward.1} parent=35 // pred_region
        %p280 = scmp.lt.s32.totalorder %s19, 0
        %s281 = scalar_select %p280, %s19, 0
        %p282 = scmp.lt.s32.totalorder %s20, 1
        %s283 = scalar_select %p282, %s20, 1
        %s284 = smul.addr %s281, 2
        %s285 = sadd.s32 %s283, %s284
        %s286 = smul.addr %s285, 8
        %s287 = scalar_lea.vmem %s2, %s286
      $region40: #{bit_estimator_forward.1} parent=35 // pred_fallthru
        _
    $region36: #{bit_estimator_forward.1} parent=5 // pred_fallthru
      _
  $region6: #{bit_estimator_forward.1} parent=0 // loop_footer
    %s12 = sadd.s32 1, %s8
  $region7: #{bit_estimator_forward.1} parent=0 // loop_footer_branch
    %7 = sbr.rel target = $region3
  $region8: #{bit_estimator_forward.1} parent=0 // loop_exit
    _

</llo_original>
